<compile_context>
chip_gen: v6e
topology: v6e:2x2x1
jax: 0.10.0
libtpu: 0.0.40
codegen_flags: <defaults>
</compile_context>

<pallas_src>
import numpy as np
import jax
import jax.numpy as jnp
from jax.experimental import pallas as pl
from jax.experimental.pallas import tpu as pltpu


# --------------------------------------------------------------------------
# Positional-encoding table (matches the torch buffer, incl. odd d_model).
# --------------------------------------------------------------------------
def _build_pe(d_model: int, max_seq_length: int) -> jnp.ndarray:
    pe = np.zeros((max_seq_length, d_model), dtype=np.float32)
    position = np.arange(0, max_seq_length, dtype=np.float32)[:, None]
    div_term = np.exp(
        np.arange(0, d_model, 2, dtype=np.float32) * (-np.log(10000.0) / d_model)
    )
    pe[:, 0::2] = np.sin(position * div_term)
    pe[:, 1::2] = np.cos(position * div_term[: d_model // 2])
    return jnp.asarray(pe)  # (max_seq_length, d_model), float32


# --------------------------------------------------------------------------
# Kernel: lane-dense broadcast add.  x_ref: (tr, tc), pe_ref: (1, tc).
# --------------------------------------------------------------------------
def _pe_add_kernel(x_ref, pe_ref, o_ref):
    o_ref[...] = (x_ref[...] + pe_ref[...]).astype(o_ref.dtype)


# --------------------------------------------------------------------------
# Tiling policy.
# --------------------------------------------------------------------------
_TILE_BYTES = 4 << 20          # per-x-tile target (HBM-roofline plateau, byte-based)
_MAX_TC_LANES = 16384          # column tile cap: wide-and-short tiles, long DMA rows
_MAX_FOOTPRINT = 36 << 20      # above this, fall back to XLA rather than blow VMEM
_SMALL_INPUT_BYTES = 2 << 20   # below this, plain XLA add beats pallas_call overhead


def _sublane_multiple(itemsize: int) -> int:
    # Packed sublane tiling: 8 rows for 4-byte, 16 for 2-byte, 32 for 1-byte dtypes.
    return 8 * max(1, 4 // itemsize)


def _choose_tiles(B: int, SD: int, itemsize: int):
    """Pick (row_tile, col_tile) obeying the (8,128) 'multiple or full' rule."""
    sub = _sublane_multiple(itemsize)
    # Column (lane) tile first: as wide as possible, multiple of 128 or full extent.
    if SD % 128 == 0:
        tc = min(SD, _MAX_TC_LANES)
    else:
        tc = SD
    # Row tile from the byte budget: multiple of the packed sublane count, or full.
    if B % sub == 0:
        tr = (_TILE_BYTES // max(tc * itemsize, 1)) // sub * sub
        tr = min(B, max(sub, tr))
    else:
        tr = B
    return tr, tc


def _vmem_footprint(tr: int, tc: int, itemsize: int) -> int:
    x_tile = tr * tc * itemsize
    pe_tile = 8 * 4 * tc           # (1, tc) block pads to 8 sublanes of 32-bit words
    return 2 * 2 * x_tile + 2 * pe_tile   # in + out double-buffered, pe double-buffered


# --------------------------------------------------------------------------
# Pallas path on the lane-dense 2-D view.
# --------------------------------------------------------------------------
def _pe_add_pallas(x2: jnp.ndarray, pe_row: jnp.ndarray):
    B, SD = x2.shape
    itemsize = jnp.dtype(x2.dtype).itemsize
    tr, tc = _choose_tiles(B, SD, itemsize)

    footprint = _vmem_footprint(tr, tc, itemsize)
    if footprint > _MAX_FOOTPRINT:
        return None  # ragged shape that would blow scoped VMEM -> caller falls back

    # Explicit scoped-VMEM limit: covers the >16 MiB footprint on v5e's default,
    # stays well under v7x's 64 MiB physical VMEM.
    vmem_limit = int(min(48 << 20, max(footprint + (8 << 20), 32 << 20)))

    n_col = pl.cdiv(SD, tc)
    n_row = pl.cdiv(B, tr)

    return pl.pallas_call(
        _pe_add_kernel,
        out_shape=jax.ShapeDtypeStruct((B, SD), x2.dtype),
        # Column axis outermost, batch/row innermost -> each pe tile is DMA'd once
        # and stays resident in VMEM across all batch tiles (per core).
        grid=(n_col, n_row),
        in_specs=[
            pl.BlockSpec((tr, tc), lambda j, i: (i, j)),   # x tile
            pl.BlockSpec((1, tc), lambda j, i: (0, j)),    # pe tile (depends on j only)
        ],
        out_specs=pl.BlockSpec((tr, tc), lambda j, i: (i, j)),
        compiler_params=pltpu.CompilerParams(
            # Pure elementwise add, no carried state: both axes parallel so the
            # second TensorCore on v7x is used even when n_col == 1.
            dimension_semantics=("parallel", "parallel"),
            vmem_limit_bytes=vmem_limit,
        ),
    )(x2, pe_row)


# --------------------------------------------------------------------------
# Module-equivalent wrapper with cached, pre-cast pe rows.
# --------------------------------------------------------------------------
class PositionalEncoding:
    """Pallas-backed equivalent of the torch PositionalEncoding module."""

    def __init__(self, d_model: int, max_seq_length: int = 20):
        self.d_model = d_model
        self.max_seq_length = max_seq_length
        self._pe = _build_pe(d_model, max_seq_length)     # (max_seq_length, d_model) f32
        self._row_cache = {}                               # (S, dtype) -> (1, S*D) row

    def _pe_row(self, seq_len: int, dtype) -> jnp.ndarray:
        key = (seq_len, jnp.dtype(dtype).name)
        row = self._row_cache.get(key)
        if row is None:
            # Note: casting the table to x.dtype (e.g. bf16) before the add differs
            # from torch by <= 1 ulp of the narrow dtype.
            row = self._pe[:seq_len, :].reshape(1, seq_len * self.d_model).astype(dtype)
            self._row_cache[key] = row
        return row

    def __call__(self, x: jnp.ndarray, *, force_pallas: bool = False) -> jnp.ndarray:
        B, S, D = x.shape
        assert D == self.d_model and S <= self.max_seq_length
        x2 = x.reshape(B, S * D)                # lane-dense view: last dim = S*D lanes
        pe_row = self._pe_row(S, x.dtype)
        itemsize = jnp.dtype(x.dtype).itemsize

        out2 = None
        if force_pallas or (B * S * D * itemsize >= _SMALL_INPUT_BYTES):
            out2 = _pe_add_pallas(x2, pe_row)
        if out2 is None:
            out2 = x2 + pe_row                  # tiny / ragged shapes: plain XLA add
        return out2.reshape(B, S, D)


def positional_encoding_forward(x: jnp.ndarray, pe_full: jnp.ndarray,
                                *, force_pallas: bool = False) -> jnp.ndarray:
    """Functional form. x: (B, S, D); pe_full: (max_seq_length, D) f32 table."""
    B, S, D = x.shape
    x2 = x.reshape(B, S * D)
    pe_row = pe_full[:S, :].reshape(1, S * D).astype(x.dtype)
    itemsize = jnp.dtype(x.dtype).itemsize

    out2 = None
    if force_pallas or (B * S * D * itemsize >= _SMALL_INPUT_BYTES):
        out2 = _pe_add_pallas(x2, pe_row)
    if out2 is None:
        out2 = x2 + pe_row
    return out2.reshape(B, S, D)


if __name__ == "__main__":
    d_model = 32
    max_seq_length = 20
    batch = 2
    seq_len = 8

    module = PositionalEncoding(d_model, max_seq_length)

    key = jax.random.PRNGKey(0)
    x = jax.random.normal(key, (batch, seq_len, d_model), dtype=jnp.float32)

    # Force the Pallas path so the kernel actually compiles and runs on TPU
    # (the test shape is below the small-input XLA fallback threshold).
    out = module(x, force_pallas=True)
    out = jax.block_until_ready(out)

    # Reference check (plain JAX / numpy)
    ref = x + module._pe[None, :seq_len, :]
    np.testing.assert_allclose(np.asarray(out), np.asarray(ref), rtol=1e-6, atol=1e-6)

    # Also sanity-check the default (small-input fallback) path.
    out_fb = jax.block_until_ready(module(x))
    np.testing.assert_allclose(np.asarray(out_fb), np.asarray(ref), rtol=1e-6, atol=1e-6)

    print("KERNEL_OK")
</pallas_src>

<mosaic_0001>
module attributes {stable_mosaic.version = 11 : i64} {
  func.func @_pe_add_kernel(%arg0: i32, %arg1: i32, %arg2: memref<2x256xf32, #tpu.memory_space<vmem>>, %arg3: memref<1x256xf32, #tpu.memory_space<vmem>>, %arg4: memref<2x256xf32, #tpu.memory_space<vmem>>) attributes {dimension_semantics = [#tpu.dimension_semantics<parallel>, #tpu.dimension_semantics<parallel>], iteration_bounds = array<i64: 1, 1>, scalar_prefetch = 0 : i64, scratch_operands = 0 : i64, tpu.core_type = #tpu.core_type<tc>, window_params = [{transform_indices = @transform_0, window_bounds = array<i64: 2, 256>}, {transform_indices = @transform_1, window_bounds = array<i64: 1, 256>}, {transform_indices = @transform_2, window_bounds = array<i64: 2, 256>}]} {
    %c0 = arith.constant 0 : index
    %c0_0 = arith.constant 0 : index
    %0 = vector.load %arg2[%c0, %c0_0] : memref<2x256xf32, #tpu.memory_space<vmem>>, vector<2x256xf32>
    %c0_1 = arith.constant 0 : index
    %c0_2 = arith.constant 0 : index
    %1 = vector.load %arg3[%c0_1, %c0_2] : memref<1x256xf32, #tpu.memory_space<vmem>>, vector<1x256xf32>
    %2 = vector.broadcast %1 : vector<1x256xf32> to vector<2x256xf32>
    %3 = arith.addf %0, %2 : vector<2x256xf32>
    %c0_3 = arith.constant 0 : index
    %c0_4 = arith.constant 0 : index
    %4 = vector.load %arg4[%c0_3, %c0_4] : memref<2x256xf32, #tpu.memory_space<vmem>>, vector<2x256xf32>
    tpu.vector_store %arg4[%c0_3, %c0_4], %3 {strides = array<i32>} : memref<2x256xf32, #tpu.memory_space<vmem>>, vector<2x256xf32>,
    return
  }
  func.func @transform_0(%arg0: i32, %arg1: i32) -> (i32, i32) {
    %c0_i32 = arith.constant 0 : i32
    return %arg1, %arg0 : i32, i32
  }
  func.func @transform_1(%arg0: i32, %arg1: i32) -> (i32, i32) {
    %c0_i32 = arith.constant 0 : i32
    %c0_i32_0 = arith.constant 0 : i32
    return %c0_i32, %arg0 : i32, i32
  }
  func.func @transform_2(%arg0: i32, %arg1: i32) -> (i32, i32) {
    %c0_i32 = arith.constant 0 : i32
    return %arg1, %arg0 : i32, i32
  }
}

</mosaic_0001>

<llo_original>
// kernel: tpu_custom_call.1
$region0: #{tpu_custom_call.1}
  #allocation0 [shape = 'u32[]', space=smem, size = 0x4, offset = 0x4, fixed_abs, tag = 'smem constant byte address 0x4 - core index']
  #allocation1 [shape = 'u32[144,128]{1,0:T(1,128)}', space=vmem, size = 0x12000, scoped, tag = 'internal scratch']
  %s0 = inlined_call_operand.hbm [shape: f32[2,256], index: 0, kind: input, shape index: {}]
  %s1 = inlined_call_operand.hbm [shape: f32[1,256], index: 1, kind: input, shape index: {}]
  %s2 = inlined_call_operand.hbm [shape: f32[2,256], index: 2, kind: output, shape index: {}]
  %s3 = sld [smem:[#allocation0]]
  $region26: #{tpu_custom_call.1} parent=0
    _
  %s5 = ssub.s32 1, %s3
  %s6 = scalar_select 0, %s5, %s3
  $region1: #{tpu_custom_call.1} parent=0
    #allocation2 [shape = 'u8[2048]{0}', space=vmem, size = 0x800, scoped, tag = 'input window, operand 0, single buffered']
    #allocation3 [shape = 's32[1]{0}', space=sflag, size = 0x4, scoped, tag = 'scoped memory for tpu_custom_call.1']
    #allocation4 [shape = 's32[1]{0}', space=sflag, size = 0x4, scoped, tag = 'scoped memory for tpu_custom_call.1']
    #allocation5 [shape = 'u8[1024]{0}', space=vmem, size = 0x400, scoped, tag = 'input window, operand 1, single buffered']
    #allocation6 [shape = 's32[1]{0}', space=sflag, size = 0x4, scoped, tag = 'scoped memory for tpu_custom_call.1']
    #allocation7 [shape = 'u8[2048]{0}', space=vmem, size = 0x800, scoped, tag = 'output window, operand 0, single buffered']
    %7 = vsyncpa [#allocation3], 0
    %8 = vsyncpa [#allocation6], 0
    %9 = vsyncpa [#allocation4], 0
    // Predicated region
    $region2: #{tpu_custom_call.1} parent=1 // pred_check
      _
    $region3: #{tpu_custom_call.1} parent=1 // pred_check_branch
      %11 = sbr.rel (0) target = $region5
    $region4: #{tpu_custom_call.1} parent=1 // pred_region
      %s13 = ssub.s32 64, 64
      %14 = vsyncadd [#allocation3], %s13
      %s16 = sshll.u32 [#allocation2], 4
      %s17 = int_to_ptr.vmem [resolvable:$true] %s16
      %19 = dma.hbm_to_vmem [thread:$0]  %s0, 64, %s17, [#allocation3]
    $region5: #{tpu_custom_call.1} parent=1 // pred_fallthru
      _
    // Predicated region
    $region6: #{tpu_custom_call.1} parent=1 // pred_check
      _
    $region7: #{tpu_custom_call.1} parent=1 // pred_check_branch
      %21 = sbr.rel (0) target = $region9
    $region8: #{tpu_custom_call.1} parent=1 // pred_region
      %s23 = ssub.s32 32, 32
      %24 = vsyncadd [#allocation6], %s23
      %s26 = sshll.u32 [#allocation5], 4
      %s27 = int_to_ptr.vmem [resolvable:$true] %s26
      %29 = dma.hbm_to_vmem [thread:$0]  %s1, 32, %s27, [#allocation6]
    $region9: #{tpu_custom_call.1} parent=1 // pred_fallthru
      _
    // Predicated region
    $region10: #{tpu_custom_call.1} parent=1 // pred_check
      _
    $region11: #{tpu_custom_call.1} parent=1 // pred_check_branch
      %31 = sbr.rel (0) target = $region13
    $region12: #{tpu_custom_call.1} parent=1 // pred_region
      %32 = dma.done [#allocation3], 64
    $region13: #{tpu_custom_call.1} parent=1 // pred_fallthru
      _
    // Predicated region
    $region14: #{tpu_custom_call.1} parent=1 // pred_check
      _
    $region15: #{tpu_custom_call.1} parent=1 // pred_check_branch
      %34 = sbr.rel (0) target = $region17
    $region16: #{tpu_custom_call.1} parent=1 // pred_region
      %35 = dma.done [#allocation6], 32
    $region17: #{tpu_custom_call.1} parent=1 // pred_fallthru
      _
    %v36 = vld [vmem:[#allocation2] sm:$0xf]
    %v37 = vld [vmem:[#allocation5] sm:$0x3]
    %v39 = vlaneseq
    %v40 = vshrl.u32 %v39, 7
    %v41 = vsub.s32 0, %v40
    %v42 = vrot.slane %v37, %v41
    %v43 = vlaneseq
    %v44 = vshrl.u32 %v43, 7
    %v45 = vsub.s32 1, %v44
    %v46 = vrot.slane %v37, %v45
    %v47 = vcombine.low %v42, %v46
    %v49 = vunpack.c.l.s4 1983009808
    %v50 = vunpack.c.0.s8 %v49
    %v51 = vlaneseq
    %v52 = vshrl.u32 %v51, 7
    %v53 = vsub.s32 %v50, %v52
    %v54 = vrot.slane %v47, %v53
    %v56 = vadd.f32 %v36, %v54
    %57 = vst [vmem:[#allocation7] sm:$0xf] %v56
    // Predicated region
    $region18: #{tpu_custom_call.1} parent=1 // pred_check
      _
    $region19: #{tpu_custom_call.1} parent=1 // pred_check_branch
      %59 = sbr.rel (0) target = $region21
    $region20: #{tpu_custom_call.1} parent=1 // pred_region
      %s61 = ssub.s32 64, 64
      %62 = vsyncadd [#allocation4], %s61
      %s64 = sshll.u32 [#allocation7], 4
      %s65 = int_to_ptr.vmem [resolvable:$true] %s64
      %67 = dma.vmem_to_hbm [thread:$0]  %s65, 64, %s2, [#allocation4]
    $region21: #{tpu_custom_call.1} parent=1 // pred_fallthru
      _
    // Predicated region
    $region22: #{tpu_custom_call.1} parent=1 // pred_check
      _
    $region23: #{tpu_custom_call.1} parent=1 // pred_check_branch
      %69 = sbr.rel (0) target = $region25
    $region24: #{tpu_custom_call.1} parent=1 // pred_region
      %70 = dma.done [#allocation4], 64
    $region25: #{tpu_custom_call.1} parent=1 // pred_fallthru
      _
    %71 = vsyncpa [#allocation3], 1
    %72 = vsyncpa [#allocation6], 1
    %73 = vsyncpa [#allocation4], 1

</llo_original>
